<compile_context>
chip_gen: v7x
topology: tpu7x:2x2x1
jax: 0.10.0
libtpu: 0.0.40
codegen_flags: <defaults>
</compile_context>

<pallas_src>
import math

import jax
import jax.numpy as jnp
from jax.experimental import pallas as pl
from jax.experimental.pallas import tpu as pltpu

LATENT_SIZE = 512
MAPPING_FMAPS = 512
DLATENT_SIZE = 512          # opt.dlatent_size (co-mod-gan default)
MAPPING_LAYERS = 8
LR_MUL = 0.01
LRELU_SLOPE = 0.2
ACT_GAIN = math.sqrt(2.0)   # fused_leaky_relu scale
EPS = 1e-8
W_SCALE = LR_MUL / math.sqrt(LATENT_SIZE)   # equalized-lr scale (all layers 512-in)


def g_mapping_kernel(x_ref, w_ref, b_ref, o_ref, act_ref):
    """One grid step = one mapping layer (for one batch tile).

    x_ref   : (bt, 512)        f32   input latents (same block every layer)
    w_ref   : (1, 512, 512)    bf16  this layer's raw weight (PyTorch weight.T)
    b_ref   : (1, 1, 512)      f32   this layer's raw bias
    o_ref   : (bt, 512)        f32   output styles (written on last layer only)
    act_ref : (bt, 512)        f32   running activation scratch
    """
    l = pl.program_id(1)

    # --- layer 0: load latents + PixelNorm over the feature axis --------
    @pl.when(l == 0)
    def _():
        x0 = x_ref[...].astype(jnp.float32)
        ms = jnp.mean(x0 * x0, axis=1, keepdims=True)
        act_ref[...] = x0 * jax.lax.rsqrt(ms + EPS)

    # --- EqualLinear + fused leaky relu ---------------------------------
    x = act_ref[...]
    # MXU matmul on bf16 operands with f32 accumulation; equalized-lr scale is
    # applied to the small (bt,512) result (dot is linear), never to the weight.
    z = jnp.dot(x.astype(jnp.bfloat16), w_ref[0],
                preferred_element_type=jnp.float32)
    y = z * W_SCALE + b_ref[0] * LR_MUL
    act_ref[...] = jnp.where(y >= 0.0, y, LRELU_SLOPE * y) * ACT_GAIN

    # --- last layer: write styles ----------------------------------------
    @pl.when(l == pl.num_programs(1) - 1)
    def _():
        o_ref[...] = act_ref[...].astype(o_ref.dtype)


def g_mapping(latents_in, w_stack, b_stack, *, batch_tile=256):
    """latents_in: (B, 512) f32 -> styles: (B, DLATENT_SIZE) f32.

    w_stack: (L, 512, 512) raw EqualLinear weights (transposed, any float dtype;
             cast to bf16 once here).  b_stack: (L, 1, 512) f32 raw biases.
    """
    B = latents_in.shape[0]
    L = w_stack.shape[0]
    bt = B if B <= batch_tile else batch_tile
    assert B % bt == 0, "batch must be a multiple of the batch tile"

    w_bf16 = w_stack.astype(jnp.bfloat16)           # one-time cast, outside kernel
    b_f32 = b_stack.astype(jnp.float32)

    flops = 2 * B * LATENT_SIZE * DLATENT_SIZE * L
    bytes_accessed = (w_bf16.size * 2 + b_f32.size * 4
                      + B * LATENT_SIZE * 4 + B * DLATENT_SIZE * 4)

    return pl.pallas_call(
        g_mapping_kernel,
        out_shape=jax.ShapeDtypeStruct((B, DLATENT_SIZE), jnp.float32),
        grid=(B // bt, L),
        in_specs=[
            pl.BlockSpec((bt, LATENT_SIZE), lambda b, l: (b, 0)),        # x
            pl.BlockSpec((1, LATENT_SIZE, MAPPING_FMAPS),
                         lambda b, l: (l, 0, 0)),                        # weights
            pl.BlockSpec((1, 1, MAPPING_FMAPS), lambda b, l: (l, 0, 0)), # biases
        ],
        out_specs=pl.BlockSpec((bt, DLATENT_SIZE), lambda b, l: (b, 0)),
        scratch_shapes=[pltpu.VMEM((bt, MAPPING_FMAPS), jnp.float32)],
        compiler_params=pltpu.CompilerParams(
            dimension_semantics=("parallel", "arbitrary")),
        cost_estimate=pl.CostEstimate(
            flops=flops, transcendentals=B, bytes_accessed=bytes_accessed),
    )(latents_in, w_bf16, b_f32)


def init_params(key):
    """Deterministic parameters matching EqualLinear.__init__ layout:
       weight ~ randn(out, in) / lr_mul   (stored here transposed: (in, out))
       bias   ~ randn (nonzero to exercise the bias path)
    """
    ws, bs = [], []
    dim_in = LATENT_SIZE
    for layer_idx in range(MAPPING_LAYERS):
        fmaps = DLATENT_SIZE if layer_idx == MAPPING_LAYERS - 1 else MAPPING_FMAPS
        key, kw, kb = jax.random.split(key, 3)
        w = jax.random.normal(kw, (dim_in, fmaps), dtype=jnp.float32) / LR_MUL
        b = jax.random.normal(kb, (1, fmaps), dtype=jnp.float32)
        ws.append(w)
        bs.append(b)
        dim_in = fmaps
    return jnp.stack(ws, axis=0), jnp.stack(bs, axis=0)


def g_mapping_ref(latents_in, w_stack, b_stack):
    """Pure-JAX reference (mirrors the PyTorch forward, with the same bf16
    weight precision the kernel uses)."""
    x = latents_in.astype(jnp.float32)
    x = x * jax.lax.rsqrt(jnp.mean(x * x, axis=1, keepdims=True) + EPS)
    w_bf16 = w_stack.astype(jnp.bfloat16)
    for l in range(MAPPING_LAYERS):
        z = jnp.dot(x.astype(jnp.bfloat16), w_bf16[l],
                    preferred_element_type=jnp.float32)
        y = z * W_SCALE + b_stack[l] * LR_MUL
        x = jnp.where(y >= 0.0, y, LRELU_SLOPE * y) * ACT_GAIN
    return x


if __name__ == "__main__":
    key = jax.random.PRNGKey(0)
    k_param, k_x = jax.random.split(key)

    w_stack, b_stack = init_params(k_param)
    # batch of 8 latent vectors (small but sublane-aligned)
    latents_in = jax.random.normal(k_x, (8, LATENT_SIZE), dtype=jnp.float32)

    styles = g_mapping(latents_in, w_stack, b_stack)
    styles = jax.block_until_ready(styles)

    ref = g_mapping_ref(latents_in, w_stack, b_stack)
    assert styles.shape == (8, DLATENT_SIZE)
    assert jnp.allclose(styles, ref, atol=2e-2, rtol=2e-2), "mismatch vs reference"

    print("KERNEL_OK")
</pallas_src>

<mosaic_0001>
module attributes {stable_mosaic.version = 11 : i64} {
  func.func @g_mapping_kernel(%arg0: i32, %arg1: i32, %arg2: memref<8x512xf32, #tpu.memory_space<vmem>>, %arg3: memref<1x512x512xbf16, #tpu.memory_space<vmem>>, %arg4: memref<1x1x512xf32, #tpu.memory_space<vmem>>, %arg5: memref<8x512xf32, #tpu.memory_space<vmem>>, %arg6: memref<8x512xf32, #tpu.memory_space<vmem>>) attributes {dimension_semantics = [#tpu.dimension_semantics<parallel>, #tpu.dimension_semantics<arbitrary>], iteration_bounds = array<i64: 1, 8>, scalar_prefetch = 0 : i64, scratch_operands = 1 : i64, tpu.core_type = #tpu.core_type<tc>, window_params = [{transform_indices = @transform_0, window_bounds = array<i64: 8, 512>}, {transform_indices = @transform_1, window_bounds = array<i64: 1, 512, 512>}, {transform_indices = @transform_2, window_bounds = array<i64: 1, 1, 512>}, {transform_indices = @transform_3, window_bounds = array<i64: 8, 512>}]} {
    %c0_i32 = arith.constant 0 : i32
    %0 = arith.cmpi eq, %arg1, %c0_i32 : i32
    %1 = arith.extui %0 : i1 to i32
    %c0_i32_0 = arith.constant 0 : i32
    %2 = arith.cmpi ne, %1, %c0_i32_0 : i32
    scf.if %2 {
      %c0_16 = arith.constant 0 : index
      %c0_17 = arith.constant 0 : index
      %27 = vector.load %arg2[%c0_16, %c0_17] : memref<8x512xf32, #tpu.memory_space<vmem>>, vector<8x512xf32>
      %28 = arith.mulf %27, %27 : vector<8x512xf32>
      %cst_18 = arith.constant dense<0.000000e+00> : vector<8xf32>
      %29 = vector.multi_reduction <add>, %28, %cst_18 [1] : vector<8x512xf32> to vector<8xf32>
      %30 = vector.shape_cast %29 : vector<8xf32> to vector<8x1xf32>
      %cst_19 = arith.constant 5.120000e+02 : f32
      %31 = vector.broadcast %cst_19 : f32 to vector<8x1xf32>
      %32 = arith.divf %30, %31 : vector<8x1xf32>
      %cst_20 = arith.constant 9.99999993E-9 : f32
      %33 = vector.broadcast %cst_20 : f32 to vector<8x1xf32>
      %34 = arith.addf %32, %33 : vector<8x1xf32>
      %35 = math.rsqrt %34 : vector<8x1xf32>
      %36 = vector.broadcast %35 : vector<8x1xf32> to vector<8x512xf32>
      %37 = arith.mulf %27, %36 : vector<8x512xf32>
      %c0_21 = arith.constant 0 : index
      %c0_22 = arith.constant 0 : index
      %38 = vector.load %arg6[%c0_21, %c0_22] : memref<8x512xf32, #tpu.memory_space<vmem>>, vector<8x512xf32>
      tpu.vector_store %arg6[%c0_21, %c0_22], %37 {strides = array<i32>} : memref<8x512xf32, #tpu.memory_space<vmem>>, vector<8x512xf32>,
    } else {
    }
    %c0 = arith.constant 0 : index
    %c0_1 = arith.constant 0 : index
    %3 = vector.load %arg6[%c0, %c0_1] : memref<8x512xf32, #tpu.memory_space<vmem>>, vector<8x512xf32>
    %4 = arith.truncf %3 : vector<8x512xf32> to vector<8x512xbf16>
    %c0_2 = arith.constant 0 : index
    %c0_3 = arith.constant 0 : index
    %c0_4 = arith.constant 0 : index
    %5 = vector.load %arg3[%c0_2, %c0_3, %c0_4] : memref<1x512x512xbf16, #tpu.memory_space<vmem>>, vector<1x512x512xbf16>
    %6 = vector.shape_cast %5 : vector<1x512x512xbf16> to vector<512x512xbf16>
    %cst = arith.constant dense<0.000000e+00> : vector<8x512xf32>
    %7 = tpu.matmul %4, %6, %cst {dimension_numbers = #tpu.dot_dimension_numbers<[1], [0], [0], [1], [0, 0, 1, 1], [], []>} : vector<8x512xbf16>, vector<512x512xbf16>, vector<8x512xf32> -> vector<8x512xf32>
    %cst_5 = arith.constant 4.41941724E-4 : f32
    %8 = vector.broadcast %cst_5 : f32 to vector<8x512xf32>
    %9 = arith.mulf %7, %8 : vector<8x512xf32>
    %c0_6 = arith.constant 0 : index
    %c0_7 = arith.constant 0 : index
    %c0_8 = arith.constant 0 : index
    %10 = vector.load %arg4[%c0_6, %c0_7, %c0_8] : memref<1x1x512xf32, #tpu.memory_space<vmem>>, vector<1x1x512xf32>
    %11 = vector.shape_cast %10 : vector<1x1x512xf32> to vector<1x512xf32>
    %cst_9 = arith.constant 0.00999999977 : f32
    %12 = vector.broadcast %cst_9 : f32 to vector<1x512xf32>
    %13 = arith.mulf %11, %12 : vector<1x512xf32>
    %14 = vector.broadcast %13 : vector<1x512xf32> to vector<8x512xf32>
    %15 = arith.addf %9, %14 : vector<8x512xf32>
    %cst_10 = arith.constant 0.000000e+00 : f32
    %16 = vector.broadcast %cst_10 : f32 to vector<8x512xf32>
    %17 = arith.cmpf oge, %15, %16 : vector<8x512xf32>
    %cst_11 = arith.constant 2.000000e-01 : f32
    %18 = vector.broadcast %cst_11 : f32 to vector<8x512xf32>
    %19 = arith.mulf %18, %15 : vector<8x512xf32>
    %20 = arith.select %17, %15, %19 : vector<8x512xi1>, vector<8x512xf32>
    %cst_12 = arith.constant 1.41421354 : f32
    %21 = vector.broadcast %cst_12 : f32 to vector<8x512xf32>
    %22 = arith.mulf %20, %21 : vector<8x512xf32>
    %c0_13 = arith.constant 0 : index
    %c0_14 = arith.constant 0 : index
    %23 = vector.load %arg6[%c0_13, %c0_14] : memref<8x512xf32, #tpu.memory_space<vmem>>, vector<8x512xf32>
    tpu.vector_store %arg6[%c0_13, %c0_14], %22 {strides = array<i32>} : memref<8x512xf32, #tpu.memory_space<vmem>>, vector<8x512xf32>,
    %c7_i32 = arith.constant 7 : i32
    %24 = arith.cmpi eq, %arg1, %c7_i32 : i32
    %25 = arith.extui %24 : i1 to i32
    %c0_i32_15 = arith.constant 0 : i32
    %26 = arith.cmpi ne, %25, %c0_i32_15 : i32
    scf.if %26 {
      %c0_16 = arith.constant 0 : index
      %c0_17 = arith.constant 0 : index
      %27 = vector.load %arg6[%c0_16, %c0_17] : memref<8x512xf32, #tpu.memory_space<vmem>>, vector<8x512xf32>
      %c0_18 = arith.constant 0 : index
      %c0_19 = arith.constant 0 : index
      %28 = vector.load %arg5[%c0_18, %c0_19] : memref<8x512xf32, #tpu.memory_space<vmem>>, vector<8x512xf32>
      tpu.vector_store %arg5[%c0_18, %c0_19], %27 {strides = array<i32>} : memref<8x512xf32, #tpu.memory_space<vmem>>, vector<8x512xf32>,
    } else {
    }
    return
  }
  func.func @transform_0(%arg0: i32, %arg1: i32) -> (i32, i32) {
    %c0_i32 = arith.constant 0 : i32
    %c0_i32_0 = arith.constant 0 : i32
    return %arg0, %c0_i32 : i32, i32
  }
  func.func @transform_1(%arg0: i32, %arg1: i32) -> (i32, i32, i32) {
    %c0_i32 = arith.constant 0 : i32
    %c0_i32_0 = arith.constant 0 : i32
    %c0_i32_1 = arith.constant 0 : i32
    return %arg1, %c0_i32, %c0_i32_0 : i32, i32, i32
  }
  func.func @transform_2(%arg0: i32, %arg1: i32) -> (i32, i32, i32) {
    %c0_i32 = arith.constant 0 : i32
    %c0_i32_0 = arith.constant 0 : i32
    %c0_i32_1 = arith.constant 0 : i32
    return %arg1, %c0_i32, %c0_i32_0 : i32, i32, i32
  }
  func.func @transform_3(%arg0: i32, %arg1: i32) -> (i32, i32) {
    %c0_i32 = arith.constant 0 : i32
    %c0_i32_0 = arith.constant 0 : i32
    return %arg0, %c0_i32 : i32, i32
  }
}

</mosaic_0001>

<llo_original>
// kernel: tpu_custom_call.1
$region0: #{tpu_custom_call.1}
  #allocation0 [shape = 'u32[]', space=smem, size = 0x4, offset = 0x4, fixed_abs, tag = 'smem constant byte address 0x4 - core index']
  #allocation1 [shape = 'u32[144,128]{1,0:T(1,128)}', space=vmem, size = 0x12000, scoped, tag = 'internal scratch']
  #allocation2 [shape = 'f32[8,512]{1,0:T(8,128)}', space=vmem, size = 0x4000, scoped, tag = 'scratch operand']
  %s0 = inlined_call_operand.hbm [shape: f32[8,512], index: 0, kind: input, shape index: {}]
  %s1 = inlined_call_operand.hbm [shape: bf16[8,512,512], index: 1, kind: input, shape index: {}]
  %s2 = inlined_call_operand.hbm [shape: f32[8,1,512], index: 2, kind: input, shape index: {}]
  %s3 = inlined_call_operand.hbm [shape: f32[8,512], index: 3, kind: output, shape index: {}]
  %s4 = sld [smem:[#allocation0]]
  $region65: #{tpu_custom_call.1} parent=0
    _
  %s6 = ssub.s32 1, %s4
  %s7 = scalar_select 0, %s6, %s4
  $region1: #{tpu_custom_call.1} parent=0
    #allocation3 [shape = 'u8[16384]{0}', space=vmem, size = 0x4000, scoped, tag = 'input window, operand 0, single buffered']
    #allocation4 [shape = 's32[2]{0}', space=sflag, size = 0x8, scoped, tag = 'scoped memory for tpu_custom_call.1']
    #allocation5 [shape = 's32[2]{0}', space=sflag, size = 0x8, scoped, tag = 'scoped memory for tpu_custom_call.1']
    #allocation6 [shape = 'u8[1048576]{0}', space=vmem, size = 0x100000, scoped, tag = 'input window, operand 1']
    #allocation7 [shape = 's32[2]{0}', space=sflag, size = 0x8, scoped, tag = 'scoped memory for tpu_custom_call.1']
    #allocation8 [shape = 'u8[4096]{0}', space=vmem, size = 0x1000, scoped, tag = 'input window, operand 2']
    #allocation9 [shape = 'u8[16384]{0}', space=vmem, size = 0x4000, scoped, tag = 'output window, operand 0, single buffered']
    %8 = vsyncpa [#allocation4], 0
    %9 = vsyncpa [#allocation7], 0
    %s10 = scalar_lea.sflag [#allocation7], 1
    %11 = vsyncpa %s10, 0
    %12 = vsyncpa [#allocation5], 0
    loop: start=0, step=1, limit=10
    $region2: #{tpu_custom_call.1} parent=1 // loop_pre_header
      _
    $region3: #{tpu_custom_call.1} parent=1 // loop_header
      %s14 = sphi 0, %s18
      %p15 = scmp.ge.s32.totalorder %s14, 10
      %s21 = sphi 0, %s33
      %s22 = sphi 0, %s29
      %s23 = sphi 0, %s21
      %s24 = sphi 0, %s22
      %s25 = sphi 0, %s23
      %s26 = sphi 0, %s24
      %s36 = sphi 0, %s38
      %s39 = sphi 0, %s36
      %s40 = sphi 0, %s39
      %s56 = sphi 0, %s40
      %s62 = sphi 0, %s64
      %s65 = sphi 0, %s62
      %s66 = sphi 0, %s65
      %s82 = sphi 0, %s66
      %s88 = sphi 0, %s90
      %s91 = sphi 0, %s88
      %s92 = sphi 0, %s91
      %s108 = sphi 0, %s92
      %s114 = sphi 0, %s116
      %s117 = sphi 0, %s114
      %s118 = sphi 0, %s117
      %s134 = sphi 0, %s118
    $region4: #{tpu_custom_call.1} parent=1 // loop_header_branch
      %17 = sbr.rel (%p15) target = $region8
    $region5: #{tpu_custom_call.1} parent=1 // loop_body
      %s19 = ssub.s32 %s14, 1
      %s20 = ssub.s32 %s14, 2
      %s27 = sadd.s32 1, %s22
      %p28 = scmp.ge.s32.totalorder %s27, 8
      %s29 = scalar_select %p28, 0, %s27
      %s30 = sadd.s32 1, %s21
      %s31 = scalar_select %p28, %s30, %s21
      %p32 = scmp.ge.s32.totalorder %s31, 1
      %s33 = scalar_select %p32, 0, %s31
      %s34 = ssub.s32 %s21, %s33
      %p35 = scmp.eq.s32.totalorder %s34, 0
      %s37 = sadd.s32 %s36, 1
      %s38 = scalar_select %p35, %s36, %s37
      %p41 = pneg %p35
      %p42 = scmp.eq.s32.totalorder %s14, 7
      %p43 = por %p41, %p42
      %p44 = scmp.ne.s32.totalorder %s36, %s39
      %p45 = scmp.eq.s32.totalorder %s14, 0
      %p46 = por %p44, %p45
      %p47 = scmp.ne.s32.totalorder %s36, %s39
      %p48 = scmp.eq.s32.totalorder %s19, 7
      %p49 = por %p47, %p48
      %p50 = scmp.ne.s32.totalorder %s39, %s40
      %p51 = scmp.eq.s32.totalorder %s19, 0
      %p52 = por %p50, %p51
      %p53 = scmp.ne.s32.totalorder %s39, %s40
      %p54 = scmp.eq.s32.totalorder %s20, 7
      %p55 = por %p53, %p54
      %p57 = scmp.ne.s32.totalorder %s40, %s56
      %p58 = scmp.eq.s32.totalorder %s20, 0
      %p59 = por %p57, %p58
      %s60 = ssub.s32 %s22, %s29
      %p61 = scmp.eq.s32.totalorder %s60, 0
      %s63 = sadd.s32 %s62, 1
      %s64 = scalar_select %p61, %s62, %s63
      %p67 = pneg %p61
      %p68 = scmp.eq.s32.totalorder %s14, 7
      %p69 = por %p67, %p68
      %p70 = scmp.ne.s32.totalorder %s62, %s65
      %p71 = scmp.eq.s32.totalorder %s14, 0
      %p72 = por %p70, %p71
      %p73 = scmp.ne.s32.totalorder %s62, %s65
      %p74 = scmp.eq.s32.totalorder %s19, 7
      %p75 = por %p73, %p74
      %p76 = scmp.ne.s32.totalorder %s65, %s66
      %p77 = scmp.eq.s32.totalorder %s19, 0
      %p78 = por %p76, %p77
      %p79 = scmp.ne.s32.totalorder %s65, %s66
      %p80 = scmp.eq.s32.totalorder %s20, 7
      %p81 = por %p79, %p80
      %p83 = scmp.ne.s32.totalorder %s66, %s82
      %p84 = scmp.eq.s32.totalorder %s20, 0
      %p85 = por %p83, %p84
      %s86 = ssub.s32 %s22, %s29
      %p87 = scmp.eq.s32.totalorder %s86, 0
      %s89 = sadd.s32 %s88, 1
      %s90 = scalar_select %p87, %s88, %s89
      %p93 = pneg %p87
      %p94 = scmp.eq.s32.totalorder %s14, 7
      %p95 = por %p93, %p94
      %p96 = scmp.ne.s32.totalorder %s88, %s91
      %p97 = scmp.eq.s32.totalorder %s14, 0
      %p98 = por %p96, %p97
      %p99 = scmp.ne.s32.totalorder %s88, %s91
      %p100 = scmp.eq.s32.totalorder %s19, 7
      %p101 = por %p99, %p100
      %p102 = scmp.ne.s32.totalorder %s91, %s92
      %p103 = scmp.eq.s32.totalorder %s19, 0
      %p104 = por %p102, %p103
      %p105 = scmp.ne.s32.totalorder %s91, %s92
      %p106 = scmp.eq.s32.totalorder %s20, 7
      %p107 = por %p105, %p106
      %p109 = scmp.ne.s32.totalorder %s92, %s108
      %p110 = scmp.eq.s32.totalorder %s20, 0
      %p111 = por %p109, %p110
      %s112 = ssub.s32 %s21, %s33
      %p113 = scmp.eq.s32.totalorder %s112, 0
      %s115 = sadd.s32 %s114, 1
      %s116 = scalar_select %p113, %s114, %s115
      %p119 = pneg %p113
      %p120 = scmp.eq.s32.totalorder %s14, 7
      %p121 = por %p119, %p120
      %p122 = scmp.ne.s32.totalorder %s114, %s117
      %p123 = scmp.eq.s32.totalorder %s14, 0
      %p124 = por %p122, %p123
      %p125 = scmp.ne.s32.totalorder %s114, %s117
      %p126 = scmp.eq.s32.totalorder %s19, 7
      %p127 = por %p125, %p126
      %p128 = scmp.ne.s32.totalorder %s117, %s118
      %p129 = scmp.eq.s32.totalorder %s19, 0
      %p130 = por %p128, %p129
      %p131 = scmp.ne.s32.totalorder %s117, %s118
      %p132 = scmp.eq.s32.totalorder %s20, 7
      %p133 = por %p131, %p132
      %p135 = scmp.ne.s32.totalorder %s118, %s134
      %p136 = scmp.eq.s32.totalorder %s20, 0
      %p137 = por %p135, %p136
      %p138 = scmp.le.s32.totalorder 1, %s14
      %p139 = scmp.lt.s32.totalorder %s14, 9
      %p140 = pnand %p138, %p139
      %p141 = pneg %p140
      // Predicated region
      $region9: #{tpu_custom_call.1} parent=5 // pred_check
        _
      $region10: #{tpu_custom_call.1} parent=5 // pred_check_branch
        %143 = sbr.rel (%p140) target = $region12
      $region11: #{tpu_custom_call.1} parent=5 // pred_region
        %s144 = ssub.s32 %s14, 1
        // Predicated region
        $region13: #{tpu_custom_call.1} parent=11 // pred_check
          %p145 = pneg %p52
        $region14: #{tpu_custom_call.1} parent=11 // pred_check_branch
          %147 = sbr.rel (%p145) target = $region16
        $region15: #{tpu_custom_call.1} parent=11 // pred_region
          %s149 = ssub.s32 512, 512
          %150 = vsyncadd [#allocation4], %s149
          %s151 = smul.addr %s23, 4
          %s152 = smul.addr %s151, 128
          %s153 = scalar_lea.hbm %s0, %s152
          %s155 = sshll.u32 [#allocation3], 4
          %s156 = int_to_ptr.vmem [resolvable:$true] %s155
          %158 = dma.hbm_to_vmem [thread:$0]  %s153, 512, %s156, [#allocation4]
        $region16: #{tpu_custom_call.1} parent=11 // pred_fallthru
          _
      $region12: #{tpu_custom_call.1} parent=5 // pred_fallthru
        _
      %p159 = scmp.lt.s32.totalorder %s14, 8
      // Predicated region
      $region17: #{tpu_custom_call.1} parent=5 // pred_check
        %p160 = pneg %p159
      $region18: #{tpu_custom_call.1} parent=5 // pred_check_branch
        %162 = sbr.rel (%p160) target = $region20
      $region19: #{tpu_custom_call.1} parent=5 // pred_region
        // Predicated region
        $region21: #{tpu_custom_call.1} parent=19 // pred_check
          %p163 = pneg %p72
        $region22: #{tpu_custom_call.1} parent=19 // pred_check_branch
          %165 = sbr.rel (%p163) target = $region24
        $region23: #{tpu_custom_call.1} parent=19 // pred_region
          %s166 = sand.u32 %s14, 1
          %s167 = scalar_lea.sflag [#allocation7], %s166
          %s168 = sand.u32 %s62, 1
          %s169 = smul.addr %s168, 1024
          %s170 = scalar_lea.vmem [#allocation6], %s169
          %s172 = ssub.s32 16384, 16384
          %173 = vsyncadd %s167, %s172
          %s174 = smul.addr %s22, 256
          %s175 = smul.addr %s174, 64
          %s176 = scalar_lea.hbm %s1, %s175
          %s177 = sshll.u32 %s170, 4
          %s178 = int_to_ptr.vmem [resolvable:$true] %s177
          %183 = dma.hbm_to_vmem [thread:$0]  %s176, 16384, %s178, %s167, 256, 256, 16
        $region24: #{tpu_custom_call.1} parent=19 // pred_fallthru
          _
        // Predicated region
        $region25: #{tpu_custom_call.1} parent=19 // pred_check
          %p184 = pneg %p98
        $region26: #{tpu_custom_call.1} parent=19 // pred_check_branch
          %186 = sbr.rel (%p184) target = $region28
        $region27: #{tpu_custom_call.1} parent=19 // pred_region
          %s187 = sand.u32 %s14, 1
          %s188 = scalar_lea.sflag [#allocation7], %s187
          %s189 = sand.u32 %s88, 1
          %s190 = smul.addr %s189, 4
          %s191 = scalar_lea.vmem [#allocation8], %s190
          %s193 = ssub.s32 64, 64
          %194 = vsyncadd %s188, %s193
          %s195 = smul.addr %s22, 4
          %s196 = smul.addr %s195, 16
          %s197 = scalar_lea.hbm %s2, %s196
          %s199 = sshll.u32 %s191, 4
          %s200 = int_to_ptr.vmem [resolvable:$true] %s199
          %202 = dma.hbm_to_vmem [thread:$0]  %s197, 64, %s200, %s188
        $region28: #{tpu_custom_call.1} parent=19 // pred_fallthru
          _
      $region20: #{tpu_custom_call.1} parent=5 // pred_fallthru
        _
      %p203 = scmp.le.s32.totalorder 1, %s14
      %p204 = scmp.lt.s32.totalorder %s14, 9
      %p205 = pnand %p203, %p204
      %p206 = pneg %p205
      // Predicated region
      $region29: #{tpu_custom_call.1} parent=5 // pred_check
        _
      $region30: #{tpu_custom_call.1} parent=5 // pred_check_branch
        %208 = sbr.rel (%p205) target = $region32
      $region31: #{tpu_custom_call.1} parent=5 // pred_region
        %s209 = ssub.s32 %s14, 1
        // Predicated region
        $region33: #{tpu_custom_call.1} parent=31 // pred_check
          %p210 = pneg %p52
        $region34: #{tpu_custom_call.1} parent=31 // pred_check_branch
          %212 = sbr.rel (%p210) target = $region36
        $region35: #{tpu_custom_call.1} parent=31 // pred_region
          %213 = dma.done [#allocation4], 512
        $region36: #{tpu_custom_call.1} parent=31 // pred_fallthru
          _
        %s214 = sand.u32 %s19, 1
        %s215 = scalar_lea.sflag [#allocation7], %s214
        %s216 = sand.u32 %s65, 1
        %s217 = smul.addr %s216, 1024
        %s218 = scalar_lea.vmem [#allocation6], %s217
        // Predicated region
        $region37: #{tpu_custom_call.1} parent=31 // pred_check
          %p219 = pneg %p78
        $region38: #{tpu_custom_call.1} parent=31 // pred_check_branch
          %221 = sbr.rel (%p219) target = $region40
        $region39: #{tpu_custom_call.1} parent=31 // pred_region
          %222 = dma.done %s215, 16384
        $region40: #{tpu_custom_call.1} parent=31 // pred_fallthru
          _
        %s223 = sand.u32 %s19, 1
        %s224 = scalar_lea.sflag [#allocation7], %s223
        %s225 = sand.u32 %s91, 1
        %s226 = smul.addr %s225, 4
        %s227 = scalar_lea.vmem [#allocation8], %s226
        // Predicated region
        $region41: #{tpu_custom_call.1} parent=31 // pred_check
          %p228 = pneg %p104
        $region42: #{tpu_custom_call.1} parent=31 // pred_check_branch
          %230 = sbr.rel (%p228) target = $region44
        $region43: #{tpu_custom_call.1} parent=31 // pred_region
          %231 = dma.done %s224, 64
        $region44: #{tpu_custom_call.1} parent=31 // pred_fallthru
          _
        %p232 = pneg %p52
        %p233 = pneg %p49
        %s234 = sand.u32 %s19, 1
        %s235 = scalar_lea.sflag [#allocation7], %s234
        %s236 = sand.u32 %s65, 1
        %s237 = smul.addr %s236, 1024
        %s238 = scalar_lea.vmem [#allocation6], %s237
        %p239 = pneg %p78
        %p240 = pneg %p75
        %s241 = sand.u32 %s19, 1
        %s242 = scalar_lea.sflag [#allocation7], %s241
        %s243 = sand.u32 %s91, 1
        %s244 = smul.addr %s243, 4
        %s245 = scalar_lea.vmem [#allocation8], %s244
        %p246 = pneg %p104
        %p247 = pneg %p101
        %p248 = pneg %p130
        %p249 = pneg %p127
        %p250 = scmp.eq.s32.totalorder %s24, 0
        // Predicated region
        $region45: #{tpu_custom_call.1} parent=31 // pred_check
          %p251 = pneg %p250
        $region46: #{tpu_custom_call.1} parent=31 // pred_check_branch
          %253 = sbr.rel (%p251) target = $region48
        $region47: #{tpu_custom_call.1} parent=31 // pred_region
          %v254 = vld [vmem:[#allocation3] sm:$0xff]
          %v255 = vld [vmem:[#allocation3 + $0x8] sm:$0xff]
          %v256 = vld [vmem:[#allocation3 + $0x10] sm:$0xff]
          %v257 = vld [vmem:[#allocation3 + $0x18] sm:$0xff]
          %v258 = vmul.f32 %v254, %v254
          %v259 = vmul.f32 %v255, %v255
          %v260 = vmul.f32 %v256, %v256
          %v261 = vmul.f32 %v257, %v257
          %v262 = vadd.f32 %v258, %v259
          %v263 = vadd.f32 %v262, %v260
          %v264 = vadd.f32 %v263, %v261
          %265 = vadd.xlane.f32.xlu0 %v264
          %v266 = vpop.xlane.xlu0 %265
          %v267 = vrcp.pop 512.0
          %v268 = vmul.f32 %v266, %v267
          %v269 = vadd.f32 %v268, 1e-08
          %v270 = vrsqrt.pop %v269
          %v271 = vmul.f32 %v254, %v270
          %v272 = vmul.f32 %v255, %v270
          %v273 = vmul.f32 %v256, %v270
          %v274 = vmul.f32 %v257, %v270
          %275 = vst [vmem:[#allocation2] sm:$0xff] %v271
          %276 = vst [vmem:[#allocation2 + $0x8] sm:$0xff] %v272
          %277 = vst [vmem:[#allocation2 + $0x10] sm:$0xff] %v273
          %278 = vst [vmem:[#allocation2 + $0x18] sm:$0xff] %v274
        $region48: #{tpu_custom_call.1} parent=31 // pred_fallthru
          _
        %v279 = vld [vmem:[#allocation2] sm:$0xff]
        %v280 = vld [vmem:[#allocation2 + $0x8] sm:$0xff]
        %v281 = vld [vmem:[#allocation2 + $0x10] sm:$0xff]
        %v282 = vld [vmem:[#allocation2 + $0x18] sm:$0xff]
        %v283 = vpack.c.bf16 %v279, %v279
        %v284 = vpack.c.bf16 %v280, %v280
        %v285 = vpack.c.bf16 %v281, %v281
        %v286 = vpack.c.bf16 %v282, %v282
        %v287 = vld [vmem:[%s218] sm:$0xff]
        %v288 = vld [vmem:[%s218 + $0x8] sm:$0xff]
        %v289 = vld [vmem:[%s218 + $0x10] sm:$0xff]
        %v290 = vld [vmem:[%s218 + $0x18] sm:$0xff]
        %v291 = vld [vmem:[%s218 + $0x20] sm:$0xff]
        %v292 = vld [vmem:[%s218 + $0x28] sm:$0xff]
        %v293 = vld [vmem:[%s218 + $0x30] sm:$0xff]
        %v294 = vld [vmem:[%s218 + $0x38] sm:$0xff]
        %v295 = vld [vmem:[%s218 + $0x40] sm:$0xff]
        %v296 = vld [vmem:[%s218 + $0x48] sm:$0xff]
        %v297 = vld [vmem:[%s218 + $0x50] sm:$0xff]
        %v298 = vld [vmem:[%s218 + $0x58] sm:$0xff]
        %v299 = vld [vmem:[%s218 + $0x60] sm:$0xff]
        %v300 = vld [vmem:[%s218 + $0x68] sm:$0xff]
        %v301 = vld [vmem:[%s218 + $0x70] sm:$0xff]
        %v302 = vld [vmem:[%s218 + $0x78] sm:$0xff]
        %v303 = vld [vmem:[%s218 + $0x80] sm:$0xff]
        %v304 = vld [vmem:[%s218 + $0x88] sm:$0xff]
        %v305 = vld [vmem:[%s218 + $0x90] sm:$0xff]
        %v306 = vld [vmem:[%s218 + $0x98] sm:$0xff]
        %v307 = vld [vmem:[%s218 + $0xa0] sm:$0xff]
        %v308 = vld [vmem:[%s218 + $0xa8] sm:$0xff]
        %v309 = vld [vmem:[%s218 + $0xb0] sm:$0xff]
        %v310 = vld [vmem:[%s218 + $0xb8] sm:$0xff]
        %v311 = vld [vmem:[%s218 + $0xc0] sm:$0xff]
        %v312 = vld [vmem:[%s218 + $0xc8] sm:$0xff]
        %v313 = vld [vmem:[%s218 + $0xd0] sm:$0xff]
        %v314 = vld [vmem:[%s218 + $0xd8] sm:$0xff]
        %v315 = vld [vmem:[%s218 + $0xe0] sm:$0xff]
        %v316 = vld [vmem:[%s218 + $0xe8] sm:$0xff]
        %v317 = vld [vmem:[%s218 + $0xf0] sm:$0xff]
        %v318 = vld [vmem:[%s218 + $0xf8] sm:$0xff]
        %v319 = vld [vmem:[%s218 + $0x100] sm:$0xff]
        %v320 = vld [vmem:[%s218 + $0x108] sm:$0xff]
        %v321 = vld [vmem:[%s218 + $0x110] sm:$0xff]
        %v322 = vld [vmem:[%s218 + $0x118] sm:$0xff]
        %v323 = vld [vmem:[%s218 + $0x120] sm:$0xff]
        %v324 = vld [vmem:[%s218 + $0x128] sm:$0xff]
        %v325 = vld [vmem:[%s218 + $0x130] sm:$0xff]
        %v326 = vld [vmem:[%s218 + $0x138] sm:$0xff]
        %v327 = vld [vmem:[%s218 + $0x140] sm:$0xff]
        %v328 = vld [vmem:[%s218 + $0x148] sm:$0xff]
        %v329 = vld [vmem:[%s218 + $0x150] sm:$0xff]
        %v330 = vld [vmem:[%s218 + $0x158] sm:$0xff]
        %v331 = vld [vmem:[%s218 + $0x160] sm:$0xff]
        %v332 = vld [vmem:[%s218 + $0x168] sm:$0xff]
        %v333 = vld [vmem:[%s218 + $0x170] sm:$0xff]
        %v334 = vld [vmem:[%s218 + $0x178] sm:$0xff]
        %v335 = vld [vmem:[%s218 + $0x180] sm:$0xff]
        %v336 = vld [vmem:[%s218 + $0x188] sm:$0xff]
        %v337 = vld [vmem:[%s218 + $0x190] sm:$0xff]
        %v338 = vld [vmem:[%s218 + $0x198] sm:$0xff]
        %v339 = vld [vmem:[%s218 + $0x1a0] sm:$0xff]
        %v340 = vld [vmem:[%s218 + $0x1a8] sm:$0xff]
        %v341 = vld [vmem:[%s218 + $0x1b0] sm:$0xff]
        %v342 = vld [vmem:[%s218 + $0x1b8] sm:$0xff]
        %v343 = vld [vmem:[%s218 + $0x1c0] sm:$0xff]
        %v344 = vld [vmem:[%s218 + $0x1c8] sm:$0xff]
        %v345 = vld [vmem:[%s218 + $0x1d0] sm:$0xff]
        %v346 = vld [vmem:[%s218 + $0x1d8] sm:$0xff]
        %v347 = vld [vmem:[%s218 + $0x1e0] sm:$0xff]
        %v348 = vld [vmem:[%s218 + $0x1e8] sm:$0xff]
        %v349 = vld [vmem:[%s218 + $0x1f0] sm:$0xff]
        %v350 = vld [vmem:[%s218 + $0x1f8] sm:$0xff]
        %v351 = vld [vmem:[%s218 + $0x200] sm:$0xff]
        %v352 = vld [vmem:[%s218 + $0x208] sm:$0xff]
        %v353 = vld [vmem:[%s218 + $0x210] sm:$0xff]
        %v354 = vld [vmem:[%s218 + $0x218] sm:$0xff]
        %v355 = vld [vmem:[%s218 + $0x220] sm:$0xff]
        %v356 = vld [vmem:[%s218 + $0x228] sm:$0xff]
        %v357 = vld [vmem:[%s218 + $0x230] sm:$0xff]
        %v358 = vld [vmem:[%s218 + $0x238] sm:$0xff]
        %v359 = vld [vmem:[%s218 + $0x240] sm:$0xff]
        %v360 = vld [vmem:[%s218 + $0x248] sm:$0xff]
        %v361 = vld [vmem:[%s218 + $0x250] sm:$0xff]
        %v362 = vld [vmem:[%s218 + $0x258] sm:$0xff]
        %v363 = vld [vmem:[%s218 + $0x260] sm:$0xff]
        %v364 = vld [vmem:[%s218 + $0x268] sm:$0xff]
        %v365 = vld [vmem:[%s218 + $0x270] sm:$0xff]
        %v366 = vld [vmem:[%s218 + $0x278] sm:$0xff]
        %v367 = vld [vmem:[%s218 + $0x280] sm:$0xff]
        %v368 = vld [vmem:[%s218 + $0x288] sm:$0xff]
        %v369 = vld [vmem:[%s218 + $0x290] sm:$0xff]
        %v370 = vld [vmem:[%s218 + $0x298] sm:$0xff]
        %v371 = vld [vmem:[%s218 + $0x2a0] sm:$0xff]
        %v372 = vld [vmem:[%s218 + $0x2a8] sm:$0xff]
        %v373 = vld [vmem:[%s218 + $0x2b0] sm:$0xff]
        %v374 = vld [vmem:[%s218 + $0x2b8] sm:$0xff]
        %v375 = vld [vmem:[%s218 + $0x2c0] sm:$0xff]
        %v376 = vld [vmem:[%s218 + $0x2c8] sm:$0xff]
        %v377 = vld [vmem:[%s218 + $0x2d0] sm:$0xff]
        %v378 = vld [vmem:[%s218 + $0x2d8] sm:$0xff]
        %v379 = vld [vmem:[%s218 + $0x2e0] sm:$0xff]
        %v380 = vld [vmem:[%s218 + $0x2e8] sm:$0xff]
        %v381 = vld [vmem:[%s218 + $0x2f0] sm:$0xff]
        %v382 = vld [vmem:[%s218 + $0x2f8] sm:$0xff]
        %v383 = vld [vmem:[%s218 + $0x300] sm:$0xff]
        %v384 = vld [vmem:[%s218 + $0x308] sm:$0xff]
        %v385 = vld [vmem:[%s218 + $0x310] sm:$0xff]
        %v386 = vld [vmem:[%s218 + $0x318] sm:$0xff]
        %v387 = vld [vmem:[%s218 + $0x320] sm:$0xff]
        %v388 = vld [vmem:[%s218 + $0x328] sm:$0xff]
        %v389 = vld [vmem:[%s218 + $0x330] sm:$0xff]
        %v390 = vld [vmem:[%s218 + $0x338] sm:$0xff]
        %v391 = vld [vmem:[%s218 + $0x340] sm:$0xff]
        %v392 = vld [vmem:[%s218 + $0x348] sm:$0xff]
        %v393 = vld [vmem:[%s218 + $0x350] sm:$0xff]
        %v394 = vld [vmem:[%s218 + $0x358] sm:$0xff]
        %v395 = vld [vmem:[%s218 + $0x360] sm:$0xff]
        %v396 = vld [vmem:[%s218 + $0x368] sm:$0xff]
        %v397 = vld [vmem:[%s218 + $0x370] sm:$0xff]
        %v398 = vld [vmem:[%s218 + $0x378] sm:$0xff]
        %v399 = vld [vmem:[%s218 + $0x380] sm:$0xff]
        %v400 = vld [vmem:[%s218 + $0x388] sm:$0xff]
        %v401 = vld [vmem:[%s218 + $0x390] sm:$0xff]
        %v402 = vld [vmem:[%s218 + $0x398] sm:$0xff]
        %v403 = vld [vmem:[%s218 + $0x3a0] sm:$0xff]
        %v404 = vld [vmem:[%s218 + $0x3a8] sm:$0xff]
        %v405 = vld [vmem:[%s218 + $0x3b0] sm:$0xff]
        %v406 = vld [vmem:[%s218 + $0x3b8] sm:$0xff]
        %v407 = vld [vmem:[%s218 + $0x3c0] sm:$0xff]
        %v408 = vld [vmem:[%s218 + $0x3c8] sm:$0xff]
        %v409 = vld [vmem:[%s218 + $0x3d0] sm:$0xff]
        %v410 = vld [vmem:[%s218 + $0x3d8] sm:$0xff]
        %v411 = vld [vmem:[%s218 + $0x3e0] sm:$0xff]
        %v412 = vld [vmem:[%s218 + $0x3e8] sm:$0xff]
        %v413 = vld [vmem:[%s218 + $0x3f0] sm:$0xff]
        %v414 = vld [vmem:[%s218 + $0x3f8] sm:$0xff]
        %v543 = vunpack.c.l.b16 %v287
        %v544 = vunpack.c.h.b16 %v287
        %v545 = vunpack.c.l.b16 %v288
        %v546 = vunpack.c.h.b16 %v288
        %v547 = vunpack.c.l.b16 %v289
        %v548 = vunpack.c.h.b16 %v289
        %v549 = vunpack.c.l.b16 %v290
        %v550 = vunpack.c.h.b16 %v290
        %v551 = vunpack.c.l.b16 %v291
        %v552 = vunpack.c.h.b16 %v291
        %v553 = vunpack.c.l.b16 %v292
        %v554 = vunpack.c.h.b16 %v292
        %v555 = vunpack.c.l.b16 %v293
        %v556 = vunpack.c.h.b16 %v293
        %v557 = vunpack.c.l.b16 %v294
        %v558 = vunpack.c.h.b16 %v294
        %v559 = vunpack.c.l.b16 %v295
        %v560 = vunpack.c.h.b16 %v295
        %v561 = vunpack.c.l.b16 %v296
        %v562 = vunpack.c.h.b16 %v296
        %v563 = vunpack.c.l.b16 %v297
        %v564 = vunpack.c.h.b16 %v297
        %v565 = vunpack.c.l.b16 %v298
        %v566 = vunpack.c.h.b16 %v298
        %v567 = vunpack.c.l.b16 %v299
        %v568 = vunpack.c.h.b16 %v299
        %v569 = vunpack.c.l.b16 %v300
        %v570 = vunpack.c.h.b16 %v300
        %v571 = vunpack.c.l.b16 %v301
        %v572 = vunpack.c.h.b16 %v301
        %v573 = vunpack.c.l.b16 %v302
        %v574 = vunpack.c.h.b16 %v302
        %v575 = vunpack.c.l.b16 %v303
        %v576 = vunpack.c.h.b16 %v303
        %v577 = vunpack.c.l.b16 %v304
        %v578 = vunpack.c.h.b16 %v304
        %v579 = vunpack.c.l.b16 %v305
        %v580 = vunpack.c.h.b16 %v305
        %v581 = vunpack.c.l.b16 %v306
        %v582 = vunpack.c.h.b16 %v306
        %v583 = vunpack.c.l.b16 %v307
        %v584 = vunpack.c.h.b16 %v307
        %v585 = vunpack.c.l.b16 %v308
        %v586 = vunpack.c.h.b16 %v308
        %v587 = vunpack.c.l.b16 %v309
        %v588 = vunpack.c.h.b16 %v309
        %v589 = vunpack.c.l.b16 %v310
        %v590 = vunpack.c.h.b16 %v310
        %v591 = vunpack.c.l.b16 %v311
        %v592 = vunpack.c.h.b16 %v311
        %v593 = vunpack.c.l.b16 %v312
        %v594 = vunpack.c.h.b16 %v312
        %v595 = vunpack.c.l.b16 %v313
        %v596 = vunpack.c.h.b16 %v313
        %v597 = vunpack.c.l.b16 %v314
        %v598 = vunpack.c.h.b16 %v314
        %v599 = vunpack.c.l.b16 %v315
        %v600 = vunpack.c.h.b16 %v315
        %v601 = vunpack.c.l.b16 %v316
        %v602 = vunpack.c.h.b16 %v316
        %v603 = vunpack.c.l.b16 %v317
        %v604 = vunpack.c.h.b16 %v317
        %v605 = vunpack.c.l.b16 %v318
        %v606 = vunpack.c.h.b16 %v318
        %v607 = vunpack.c.l.b16 %v319
        %v608 = vunpack.c.h.b16 %v319
        %v609 = vunpack.c.l.b16 %v320
        %v610 = vunpack.c.h.b16 %v320
        %v611 = vunpack.c.l.b16 %v321
        %v612 = vunpack.c.h.b16 %v321
        %v613 = vunpack.c.l.b16 %v322
        %v614 = vunpack.c.h.b16 %v322
        %v615 = vunpack.c.l.b16 %v323
        %v616 = vunpack.c.h.b16 %v323
        %v617 = vunpack.c.l.b16 %v324
        %v618 = vunpack.c.h.b16 %v324
        %v619 = vunpack.c.l.b16 %v325
        %v620 = vunpack.c.h.b16 %v325
        %v621 = vunpack.c.l.b16 %v326
        %v622 = vunpack.c.h.b16 %v326
        %v623 = vunpack.c.l.b16 %v327
        %v624 = vunpack.c.h.b16 %v327
        %v625 = vunpack.c.l.b16 %v328
        %v626 = vunpack.c.h.b16 %v328
        %v627 = vunpack.c.l.b16 %v329
        %v628 = vunpack.c.h.b16 %v329
        %v629 = vunpack.c.l.b16 %v330
        %v630 = vunpack.c.h.b16 %v330
        %v631 = vunpack.c.l.b16 %v331
        %v632 = vunpack.c.h.b16 %v331
        %v633 = vunpack.c.l.b16 %v332
        %v634 = vunpack.c.h.b16 %v332
        %v635 = vunpack.c.l.b16 %v333
        %v636 = vunpack.c.h.b16 %v333
        %v637 = vunpack.c.l.b16 %v334
        %v638 = vunpack.c.h.b16 %v334
        %v639 = vunpack.c.l.b16 %v335
        %v640 = vunpack.c.h.b16 %v335
        %v641 = vunpack.c.l.b16 %v336
        %v642 = vunpack.c.h.b16 %v336
        %v643 = vunpack.c.l.b16 %v337
        %v644 = vunpack.c.h.b16 %v337
        %v645 = vunpack.c.l.b16 %v338
        %v646 = vunpack.c.h.b16 %v338
        %v647 = vunpack.c.l.b16 %v339
        %v648 = vunpack.c.h.b16 %v339
        %v649 = vunpack.c.l.b16 %v340
        %v650 = vunpack.c.h.b16 %v340
        %v651 = vunpack.c.l.b16 %v341
        %v652 = vunpack.c.h.b16 %v341
        %v653 = vunpack.c.l.b16 %v342
        %v654 = vunpack.c.h.b16 %v342
        %v655 = vunpack.c.l.b16 %v343
        %v656 = vunpack.c.h.b16 %v343
        %v657 = vunpack.c.l.b16 %v344
        %v658 = vunpack.c.h.b16 %v344
        %v659 = vunpack.c.l.b16 %v345
        %v660 = vunpack.c.h.b16 %v345
        %v661 = vunpack.c.l.b16 %v346
        %v662 = vunpack.c.h.b16 %v346
        %v663 = vunpack.c.l.b16 %v347
        %v664 = vunpack.c.h.b16 %v347
        %v665 = vunpack.c.l.b16 %v348
        %v666 = vunpack.c.h.b16 %v348
        %v667 = vunpack.c.l.b16 %v349
        %v668 = vunpack.c.h.b16 %v349
        %v669 = vunpack.c.l.b16 %v350
        %v670 = vunpack.c.h.b16 %v350
        %v671 = vunpack.c.l.b16 %v351
        %v672 = vunpack.c.h.b16 %v351
        %v673 = vunpack.c.l.b16 %v352
        %v674 = vunpack.c.h.b16 %v352
        %v675 = vunpack.c.l.b16 %v353
        %v676 = vunpack.c.h.b16 %v353
        %v677 = vunpack.c.l.b16 %v354
        %v678 = vunpack.c.h.b16 %v354
        %v679 = vunpack.c.l.b16 %v355
        %v680 = vunpack.c.h.b16 %v355
        %v681 = vunpack.c.l.b16 %v356
        %v682 = vunpack.c.h.b16 %v356
        %v683 = vunpack.c.l.b16 %v357
        %v684 = vunpack.c.h.b16 %v357
        %v685 = vunpack.c.l.b16 %v358
        %v686 = vunpack.c.h.b16 %v358
        %v687 = vunpack.c.l.b16 %v359
        %v688 = vunpack.c.h.b16 %v359
        %v689 = vunpack.c.l.b16 %v360
        %v690 = vunpack.c.h.b16 %v360
        %v691 = vunpack.c.l.b16 %v361
        %v692 = vunpack.c.h.b16 %v361
        %v693 = vunpack.c.l.b16 %v362
        %v694 = vunpack.c.h.b16 %v362
        %v695 = vunpack.c.l.b16 %v363
        %v696 = vunpack.c.h.b16 %v363
        %v697 = vunpack.c.l.b16 %v364
        %v698 = vunpack.c.h.b16 %v364
        %v699 = vunpack.c.l.b16 %v365
        %v700 = vunpack.c.h.b16 %v365
        %v701 = vunpack.c.l.b16 %v366
        %v702 = vunpack.c.h.b16 %v366
        %v703 = vunpack.c.l.b16 %v367
        %v704 = vunpack.c.h.b16 %v367
        %v705 = vunpack.c.l.b16 %v368
        %v706 = vunpack.c.h.b16 %v368
        %v707 = vunpack.c.l.b16 %v369
        %v708 = vunpack.c.h.b16 %v369
        %v709 = vunpack.c.l.b16 %v370
        %v710 = vunpack.c.h.b16 %v370
        %v711 = vunpack.c.l.b16 %v371
        %v712 = vunpack.c.h.b16 %v371
        %v713 = vunpack.c.l.b16 %v372
        %v714 = vunpack.c.h.b16 %v372
        %v715 = vunpack.c.l.b16 %v373
        %v716 = vunpack.c.h.b16 %v373
        %v717 = vunpack.c.l.b16 %v374
        %v718 = vunpack.c.h.b16 %v374
        %v719 = vunpack.c.l.b16 %v375
        %v720 = vunpack.c.h.b16 %v375
        %v721 = vunpack.c.l.b16 %v376
        %v722 = vunpack.c.h.b16 %v376
        %v723 = vunpack.c.l.b16 %v377
        %v724 = vunpack.c.h.b16 %v377
        %v725 = vunpack.c.l.b16 %v378
        %v726 = vunpack.c.h.b16 %v378
        %v727 = vunpack.c.l.b16 %v379
        %v728 = vunpack.c.h.b16 %v379
        %v729 = vunpack.c.l.b16 %v380
        %v730 = vunpack.c.h.b16 %v380
        %v731 = vunpack.c.l.b16 %v381
        %v732 = vunpack.c.h.b16 %v381
        %v733 = vunpack.c.l.b16 %v382
        %v734 = vunpack.c.h.b16 %v382
        %v735 = vunpack.c.l.b16 %v383
        %v736 = vunpack.c.h.b16 %v383
        %v737 = vunpack.c.l.b16 %v384
        %v738 = vunpack.c.h.b16 %v384
        %v739 = vunpack.c.l.b16 %v385
        %v740 = vunpack.c.h.b16 %v385
        %v741 = vunpack.c.l.b16 %v386
        %v742 = vunpack.c.h.b16 %v386
        %v743 = vunpack.c.l.b16 %v387
        %v744 = vunpack.c.h.b16 %v387
        %v745 = vunpack.c.l.b16 %v388
        %v746 = vunpack.c.h.b16 %v388
        %v747 = vunpack.c.l.b16 %v389
        %v748 = vunpack.c.h.b16 %v389
        %v749 = vunpack.c.l.b16 %v390
        %v750 = vunpack.c.h.b16 %v390
        %v751 = vunpack.c.l.b16 %v391
        %v752 = vunpack.c.h.b16 %v391
        %v753 = vunpack.c.l.b16 %v392
        %v754 = vunpack.c.h.b16 %v392
        %v755 = vunpack.c.l.b16 %v393
        %v756 = vunpack.c.h.b16 %v393
        %v757 = vunpack.c.l.b16 %v394
        %v758 = vunpack.c.h.b16 %v394
        %v759 = vunpack.c.l.b16 %v395
        %v760 = vunpack.c.h.b16 %v395
        %v761 = vunpack.c.l.b16 %v396
        %v762 = vunpack.c.h.b16 %v396
        %v763 = vunpack.c.l.b16 %v397
        %v764 = vunpack.c.h.b16 %v397
        %v765 = vunpack.c.l.b16 %v398
        %v766 = vunpack.c.h.b16 %v398
        %v767 = vunpack.c.l.b16 %v399
        %v768 = vunpack.c.h.b16 %v399
        %v769 = vunpack.c.l.b16 %v400
        %v770 = vunpack.c.h.b16 %v400
        %v771 = vunpack.c.l.b16 %v401
        %v772 = vunpack.c.h.b16 %v401
        %v773 = vunpack.c.l.b16 %v402
        %v774 = vunpack.c.h.b16 %v402
        %v775 = vunpack.c.l.b16 %v403
        %v776 = vunpack.c.h.b16 %v403
        %v777 = vunpack.c.l.b16 %v404
        %v778 = vunpack.c.h.b16 %v404
        %v779 = vunpack.c.l.b16 %v405
        %v780 = vunpack.c.h.b16 %v405
        %v781 = vunpack.c.l.b16 %v406
        %v782 = vunpack.c.h.b16 %v406
        %v783 = vunpack.c.l.b16 %v407
        %v784 = vunpack.c.h.b16 %v407
        %v785 = vunpack.c.l.b16 %v408
        %v786 = vunpack.c.h.b16 %v408
        %v787 = vunpack.c.l.b16 %v409
        %v788 = vunpack.c.h.b16 %v409
        %v789 = vunpack.c.l.b16 %v410
        %v790 = vunpack.c.h.b16 %v410
        %v791 = vunpack.c.l.b16 %v411
        %v792 = vunpack.c.h.b16 %v411
        %v793 = vunpack.c.l.b16 %v412
        %v794 = vunpack.c.h.b16 %v412
        %v795 = vunpack.c.l.b16 %v413
        %v796 = vunpack.c.h.b16 %v413
        %v797 = vunpack.c.l.b16 %v414
        %v798 = vunpack.c.h.b16 %v414
        %v799 = vpack.c.b16 %v547, %v543
        %v800 = vpack.c.b16 %v548, %v544
        %v801 = vpack.c.b16 %v549, %v545
        %v802 = vpack.c.b16 %v550, %v546
        %v803 = vpack.c.b16 %v555, %v551
        %v804 = vpack.c.b16 %v556, %v552
        %v805 = vpack.c.b16 %v557, %v553
        %v806 = vpack.c.b16 %v558, %v554
        %v807 = vpack.c.b16 %v563, %v559
        %v808 = vpack.c.b16 %v564, %v560
        %v809 = vpack.c.b16 %v565, %v561
        %v810 = vpack.c.b16 %v566, %v562
        %v811 = vpack.c.b16 %v571, %v567
        %v812 = vpack.c.b16 %v572, %v568
        %v813 = vpack.c.b16 %v573, %v569
        %v814 = vpack.c.b16 %v574, %v570
        %v815 = vpack.c.b16 %v579, %v575
        %v816 = vpack.c.b16 %v580, %v576
        %v817 = vpack.c.b16 %v581, %v577
        %v818 = vpack.c.b16 %v582, %v578
        %v819 = vpack.c.b16 %v587, %v583
        %v820 = vpack.c.b16 %v588, %v584
        %v821 = vpack.c.b16 %v589, %v585
        %v822 = vpack.c.b16 %v590, %v586
        %v823 = vpack.c.b16 %v595, %v591
        %v824 = vpack.c.b16 %v596, %v592
        %v825 = vpack.c.b16 %v597, %v593
        %v826 = vpack.c.b16 %v598, %v594
        %v827 = vpack.c.b16 %v603, %v599
        %v828 = vpack.c.b16 %v604, %v600
        %v829 = vpack.c.b16 %v605, %v601
        %v830 = vpack.c.b16 %v606, %v602
        %v831 = vpack.c.b16 %v611, %v607
        %v832 = vpack.c.b16 %v612, %v608
        %v833 = vpack.c.b16 %v613, %v609
        %v834 = vpack.c.b16 %v614, %v610
        %v835 = vpack.c.b16 %v619, %v615
        %v836 = vpack.c.b16 %v620, %v616
        %v837 = vpack.c.b16 %v621, %v617
        %v838 = vpack.c.b16 %v622, %v618
        %v839 = vpack.c.b16 %v627, %v623
        %v840 = vpack.c.b16 %v628, %v624
        %v841 = vpack.c.b16 %v629, %v625
        %v842 = vpack.c.b16 %v630, %v626
        %v843 = vpack.c.b16 %v635, %v631
        %v844 = vpack.c.b16 %v636, %v632
        %v845 = vpack.c.b16 %v637, %v633
        %v846 = vpack.c.b16 %v638, %v634
        %v847 = vpack.c.b16 %v643, %v639
        %v848 = vpack.c.b16 %v644, %v640
        %v849 = vpack.c.b16 %v645, %v641
        %v850 = vpack.c.b16 %v646, %v642
        %v851 = vpack.c.b16 %v651, %v647
        %v852 = vpack.c.b16 %v652, %v648
        %v853 = vpack.c.b16 %v653, %v649
        %v854 = vpack.c.b16 %v654, %v650
        %v855 = vpack.c.b16 %v659, %v655
        %v856 = vpack.c.b16 %v660, %v656
        %v857 = vpack.c.b16 %v661, %v657
        %v858 = vpack.c.b16 %v662, %v658
        %v859 = vpack.c.b16 %v667, %v663
        %v860 = vpack.c.b16 %v668, %v664
        %v861 = vpack.c.b16 %v669, %v665
        %v862 = vpack.c.b16 %v670, %v666
        %v863 = vpack.c.b16 %v675, %v671
        %v864 = vpack.c.b16 %v676, %v672
        %v865 = vpack.c.b16 %v677, %v673
        %v866 = vpack.c.b16 %v678, %v674
        %v867 = vpack.c.b16 %v683, %v679
        %v868 = vpack.c.b16 %v684, %v680
        %v869 = vpack.c.b16 %v685, %v681
        %v870 = vpack.c.b16 %v686, %v682
        %v871 = vpack.c.b16 %v691, %v687
        %v872 = vpack.c.b16 %v692, %v688
        %v873 = vpack.c.b16 %v693, %v689
        %v874 = vpack.c.b16 %v694, %v690
        %v875 = vpack.c.b16 %v699, %v695
        %v876 = vpack.c.b16 %v700, %v696
        %v877 = vpack.c.b16 %v701, %v697
        %v878 = vpack.c.b16 %v702, %v698
        %v879 = vpack.c.b16 %v707, %v703
        %v880 = vpack.c.b16 %v708, %v704
        %v881 = vpack.c.b16 %v709, %v705
        %v882 = vpack.c.b16 %v710, %v706
        %v883 = vpack.c.b16 %v715, %v711
        %v884 = vpack.c.b16 %v716, %v712
        %v885 = vpack.c.b16 %v717, %v713
        %v886 = vpack.c.b16 %v718, %v714
        %v887 = vpack.c.b16 %v723, %v719
        %v888 = vpack.c.b16 %v724, %v720
        %v889 = vpack.c.b16 %v725, %v721
        %v890 = vpack.c.b16 %v726, %v722
        %v891 = vpack.c.b16 %v731, %v727
        %v892 = vpack.c.b16 %v732, %v728
        %v893 = vpack.c.b16 %v733, %v729
        %v894 = vpack.c.b16 %v734, %v730
        %v895 = vpack.c.b16 %v739, %v735
        %v896 = vpack.c.b16 %v740, %v736
        %v897 = vpack.c.b16 %v741, %v737
        %v898 = vpack.c.b16 %v742, %v738
        %v899 = vpack.c.b16 %v747, %v743
        %v900 = vpack.c.b16 %v748, %v744
        %v901 = vpack.c.b16 %v749, %v745
        %v902 = vpack.c.b16 %v750, %v746
        %v903 = vpack.c.b16 %v755, %v751
        %v904 = vpack.c.b16 %v756, %v752
        %v905 = vpack.c.b16 %v757, %v753
        %v906 = vpack.c.b16 %v758, %v754
        %v907 = vpack.c.b16 %v763, %v759
        %v908 = vpack.c.b16 %v764, %v760
        %v909 = vpack.c.b16 %v765, %v761
        %v910 = vpack.c.b16 %v766, %v762
        %v911 = vpack.c.b16 %v771, %v767
        %v912 = vpack.c.b16 %v772, %v768
        %v913 = vpack.c.b16 %v773, %v769
        %v914 = vpack.c.b16 %v774, %v770
        %v915 = vpack.c.b16 %v779, %v775
        %v916 = vpack.c.b16 %v780, %v776
        %v917 = vpack.c.b16 %v781, %v777
        %v918 = vpack.c.b16 %v782, %v778
        %v919 = vpack.c.b16 %v787, %v783
        %v920 = vpack.c.b16 %v788, %v784
        %v921 = vpack.c.b16 %v789, %v785
        %v922 = vpack.c.b16 %v790, %v786
        %v923 = vpack.c.b16 %v795, %v791
        %v924 = vpack.c.b16 %v796, %v792
        %v925 = vpack.c.b16 %v797, %v793
        %v926 = vpack.c.b16 %v798, %v794
        %1055 = vmatprep.subr.bf16.mxu0 %v800
        %1056 = vmatpush1.bf16.msra.mxu0 %v799
        %1057 = vmatprep.subr.bf16.mxu0 %v804
        %1058 = vmatpush1.bf16.msra.mxu0 %v803
        %1059 = vmatprep.subr.bf16.mxu0 %v808
        %1060 = vmatpush1.bf16.msra.mxu0 %v807
        %1061 = vmatprep.subr.bf16.mxu0 %v812
        %1062 = vmatpush1.bf16.msra.mxu0 %v811
        %1063 = vmatprep.subr.bf16.mxu0 %v816
        %1064 = vmatpush1.bf16.msra.mxu0 %v815
        %1065 = vmatprep.subr.bf16.mxu0 %v820
        %1066 = vmatpush1.bf16.msra.mxu0 %v819
        %1067 = vmatprep.subr.bf16.mxu0 %v824
        %1068 = vmatpush1.bf16.msra.mxu0 %v823
        %1069 = vmatprep.subr.bf16.mxu0 %v828
        %1070 = vmatpush1.bf16.msra.mxu0 %v827
        %1071 = vmatprep.subr.bf16.mxu0 %v832
        %1072 = vmatpush1.bf16.msra.mxu0 %v831
        %1073 = vmatprep.subr.bf16.mxu0 %v836
        %1074 = vmatpush1.bf16.msra.mxu0 %v835
        %1075 = vmatprep.subr.bf16.mxu0 %v840
        %1076 = vmatpush1.bf16.msra.mxu0 %v839
        %1077 = vmatprep.subr.bf16.mxu0 %v844
        %1078 = vmatpush1.bf16.msra.mxu0 %v843
        %1079 = vmatprep.subr.bf16.mxu0 %v848
        %1080 = vmatpush1.bf16.msra.mxu0 %v847
        %1081 = vmatprep.subr.bf16.mxu0 %v852
        %1082 = vmatpush1.bf16.msra.mxu0 %v851
        %1083 = vmatprep.subr.bf16.mxu0 %v856
        %1084 = vmatpush1.bf16.msra.mxu0 %v855
        %1085 = vmatprep.subr.bf16.mxu0 %v860
        %1086 = vmatpush1.bf16.msra.mxu0 %v859
        %1087 = vmatprep.mubr.bf16.mxu0 %v284
        %1088 = vmatmul.mubr.bf16.gmra.mrb[0].mxu0 %v283
        %v1089 = vpop.f32.mrb[0].mxu0
        %v1090 = vadd.f32 0.0, %v1089
        %v1091 = vpop.f32.mrb[0].mxu0
        %v1092 = vadd.f32 0.0, %v1091
        %v1093 = vpop.f32.mrb[0].mxu0
        %v1094 = vpop.f32.mrb[0].mxu0
        %1095 = vdwg.mxu0
        %1096 = vmatprep.subr.bf16.mxu0 %v864
        %1097 = vmatpush1.bf16.msra.mxu0 %v863
        %1098 = vmatprep.subr.bf16.mxu0 %v868
        %1099 = vmatpush1.bf16.msra.mxu0 %v867
        %1100 = vmatprep.subr.bf16.mxu0 %v872
        %1101 = vmatpush1.bf16.msra.mxu0 %v871
        %1102 = vmatprep.subr.bf16.mxu0 %v876
        %1103 = vmatpush1.bf16.msra.mxu0 %v875
        %1104 = vmatprep.subr.bf16.mxu0 %v880
        %1105 = vmatpush1.bf16.msra.mxu0 %v879
        %1106 = vmatprep.subr.bf16.mxu0 %v884
        %1107 = vmatpush1.bf16.msra.mxu0 %v883
        %1108 = vmatprep.subr.bf16.mxu0 %v888
        %1109 = vmatpush1.bf16.msra.mxu0 %v887
        %1110 = vmatprep.subr.bf16.mxu0 %v892
        %1111 = vmatpush1.bf16.msra.mxu0 %v891
        %1112 = vmatprep.subr.bf16.mxu0 %v896
        %1113 = vmatpush1.bf16.msra.mxu0 %v895
        %1114 = vmatprep.subr.bf16.mxu0 %v900
        %1115 = vmatpush1.bf16.msra.mxu0 %v899
        %1116 = vmatprep.subr.bf16.mxu0 %v904
        %1117 = vmatpush1.bf16.msra.mxu0 %v903
        %1118 = vmatprep.subr.bf16.mxu0 %v908
        %1119 = vmatpush1.bf16.msra.mxu0 %v907
        %1120 = vmatprep.subr.bf16.mxu0 %v912
        %1121 = vmatpush1.bf16.msra.mxu0 %v911
        %1122 = vmatprep.subr.bf16.mxu0 %v916
        %1123 = vmatpush1.bf16.msra.mxu0 %v915
        %1124 = vmatprep.subr.bf16.mxu0 %v920
        %1125 = vmatpush1.bf16.msra.mxu0 %v919
        %1126 = vmatprep.subr.bf16.mxu0 %v924
        %1127 = vmatpush1.bf16.msra.mxu0 %v923
        %1128 = vmatprep.mubr.bf16.mxu0 %v286
        %1129 = vmatmul.mubr.bf16.gmra.mrb[0].mxu0 %v285
        %v1130 = vpop.f32.mrb[0].mxu0
        %v1131 = vadd.f32 %v1090, %v1130
        %v1132 = vpop.f32.mrb[0].mxu0
        %v1133 = vadd.f32 %v1092, %v1132
        %v1134 = vpop.f32.mrb[0].mxu0
        %v1135 = vpop.f32.mrb[0].mxu0
        %1136 = vdwg.mxu0
        %1137 = vmatprep.subr.bf16.mxu0 %v802
        %1138 = vmatpush1.bf16.msra.mxu0 %v801
        %1139 = vmatprep.subr.bf16.mxu0 %v806
        %1140 = vmatpush1.bf16.msra.mxu0 %v805
        %1141 = vmatprep.subr.bf16.mxu0 %v810
        %1142 = vmatpush1.bf16.msra.mxu0 %v809
        %1143 = vmatprep.subr.bf16.mxu0 %v814
        %1144 = vmatpush1.bf16.msra.mxu0 %v813
        %1145 = vmatprep.subr.bf16.mxu0 %v818
        %1146 = vmatpush1.bf16.msra.mxu0 %v817
        %1147 = vmatprep.subr.bf16.mxu0 %v822
        %1148 = vmatpush1.bf16.msra.mxu0 %v821
        %1149 = vmatprep.subr.bf16.mxu0 %v826
        %1150 = vmatpush1.bf16.msra.mxu0 %v825
        %1151 = vmatprep.subr.bf16.mxu0 %v830
        %1152 = vmatpush1.bf16.msra.mxu0 %v829
        %1153 = vmatprep.subr.bf16.mxu0 %v834
        %1154 = vmatpush1.bf16.msra.mxu0 %v833
        %1155 = vmatprep.subr.bf16.mxu0 %v838
        %1156 = vmatpush1.bf16.msra.mxu0 %v837
        %1157 = vmatprep.subr.bf16.mxu0 %v842
        %1158 = vmatpush1.bf16.msra.mxu0 %v841
        %1159 = vmatprep.subr.bf16.mxu0 %v846
        %1160 = vmatpush1.bf16.msra.mxu0 %v845
        %1161 = vmatprep.subr.bf16.mxu0 %v850
        %1162 = vmatpush1.bf16.msra.mxu0 %v849
        %1163 = vmatprep.subr.bf16.mxu0 %v854
        %1164 = vmatpush1.bf16.msra.mxu0 %v853
        %1165 = vmatprep.subr.bf16.mxu0 %v858
        %1166 = vmatpush1.bf16.msra.mxu0 %v857
        %1167 = vmatprep.subr.bf16.mxu0 %v862
        %1168 = vmatpush1.bf16.msra.mxu0 %v861
        %1169 = vmatprep.mubr.bf16.mxu0 %v284
        %1170 = vmatmul.mubr.bf16.gmra.mrb[0].mxu0 %v283
        %v1171 = vpop.f32.mrb[0].mxu0
        %v1172 = vadd.f32 0.0, %v1171
        %v1173 = vpop.f32.mrb[0].mxu0
        %v1174 = vadd.f32 0.0, %v1173
        %v1175 = vpop.f32.mrb[0].mxu0
        %v1176 = vpop.f32.mrb[0].mxu0
        %1177 = vdwg.mxu0
        %1178 = vmatprep.subr.bf16.mxu0 %v866
        %1179 = vmatpush1.bf16.msra.mxu0 %v865
        %1180 = vmatprep.subr.bf16.mxu0 %v870
        %1181 = vmatpush1.bf16.msra.mxu0 %v869
        %1182 = vmatprep.subr.bf16.mxu0 %v874
        %1183 = vmatpush1.bf16.msra.mxu0 %v873
        %1184 = vmatprep.subr.bf16.mxu0 %v878
        %1185 = vmatpush1.bf16.msra.mxu0 %v877
        %1186 = vmatprep.subr.bf16.mxu0 %v882
        %1187 = vmatpush1.bf16.msra.mxu0 %v881
        %1188 = vmatprep.subr.bf16.mxu0 %v886
        %1189 = vmatpush1.bf16.msra.mxu0 %v885
        %1190 = vmatprep.subr.bf16.mxu0 %v890
        %1191 = vmatpush1.bf16.msra.mxu0 %v889
        %1192 = vmatprep.subr.bf16.mxu0 %v894
        %1193 = vmatpush1.bf16.msra.mxu0 %v893
        %1194 = vmatprep.subr.bf16.mxu0 %v898
        %1195 = vmatpush1.bf16.msra.mxu0 %v897
        %1196 = vmatprep.subr.bf16.mxu0 %v902
        %1197 = vmatpush1.bf16.msra.mxu0 %v901
        %1198 = vmatprep.subr.bf16.mxu0 %v906
        %1199 = vmatpush1.bf16.msra.mxu0 %v905
        %1200 = vmatprep.subr.bf16.mxu0 %v910
        %1201 = vmatpush1.bf16.msra.mxu0 %v909
        %1202 = vmatprep.subr.bf16.mxu0 %v914
        %1203 = vmatpush1.bf16.msra.mxu0 %v913
        %1204 = vmatprep.subr.bf16.mxu0 %v918
        %1205 = vmatpush1.bf16.msra.mxu0 %v917
        %1206 = vmatprep.subr.bf16.mxu0 %v922
        %1207 = vmatpush1.bf16.msra.mxu0 %v921
        %1208 = vmatprep.subr.bf16.mxu0 %v926
        %1209 = vmatpush1.bf16.msra.mxu0 %v925
        %1210 = vmatprep.mubr.bf16.mxu0 %v286
        %1211 = vmatmul.mubr.bf16.gmra.mrb[0].mxu0 %v285
        %v1212 = vpop.f32.mrb[0].mxu0
        %v1213 = vadd.f32 %v1172, %v1212
        %v1214 = vpop.f32.mrb[0].mxu0
        %v1215 = vadd.f32 %v1174, %v1214
        %v1216 = vpop.f32.mrb[0].mxu0
        %v1217 = vpop.f32.mrb[0].mxu0
        %1218 = vdwg.mxu0
        %v1219 = vmul.f32 %v1131, 0.00044194172
        %v1220 = vmul.f32 %v1133, 0.00044194172
        %v1221 = vmul.f32 %v1213, 0.00044194172
        %v1222 = vmul.f32 %v1215, 0.00044194172
        %v1223 = vld [vmem:[%s227] sm:$0xf]
        %v1224 = vmul.f32 %v1223, 0.01
        %v1226 = vlaneseq
        %v1227 = vshrl.u32 %v1226, 7
        %v1228 = vsub.s32 0, %v1227
        %v1229 = vrot.slane %v1224, %v1228
        %v1230 = vlaneseq
        %v1231 = vshrl.u32 %v1230, 7
        %v1232 = vsub.s32 1, %v1231
        %v1233 = vrot.slane %v1224, %v1232
        %v1234 = vlaneseq
        %v1235 = vshrl.u32 %v1234, 7
        %v1236 = vsub.s32 2, %v1235
        %v1237 = vrot.slane %v1224, %v1236
        %v1238 = vlaneseq
        %v1239 = vshrl.u32 %v1238, 7
        %v1240 = vsub.s32 3, %v1239
        %v1241 = vrot.slane %v1224, %v1240
        %v1246 = vadd.f32 %v1219, %v1229
        %v1247 = vadd.f32 %v1220, %v1233
        %v1248 = vadd.f32 %v1221, %v1237
        %v1249 = vadd.f32 %v1222, %v1241
        %vm1250 = vcmp.ge.f32.partialorder %v1246, 0.0
        %vm1251 = vcmp.ge.f32.partialorder %v1247, 0.0
        %vm1252 = vcmp.ge.f32.partialorder %v1248, 0.0
        %vm1253 = vcmp.ge.f32.partialorder %v1249, 0.0
        %v1254 = vmul.f32 %v1246, 0.2
        %v1255 = vmul.f32 %v1247, 0.2
        %v1256 = vmul.f32 %v1248, 0.2
        %v1257 = vmul.f32 %v1249, 0.2
        %v1258 = vsel %vm1250, %v1246, %v1254
        %v1259 = vsel %vm1251, %v1247, %v1255
        %v1260 = vsel %vm1252, %v1248, %v1256
        %v1261 = vsel %vm1253, %v1249, %v1257
        %v1262 = vmul.f32 %v1258, 1.4142135
        %v1263 = vmul.f32 %v1259, 1.4142135
        %v1264 = vmul.f32 %v1260, 1.4142135
        %v1265 = vmul.f32 %v1261, 1.4142135
        %1266 = vst [vmem:[#allocation2] sm:$0xff] %v1262
        %1267 = vst [vmem:[#allocation2 + $0x8] sm:$0xff] %v1263
        %1268 = vst [vmem:[#allocation2 + $0x10] sm:$0xff] %v1264
        %1269 = vst [vmem:[#allocation2 + $0x18] sm:$0xff] %v1265
        %p1270 = scmp.eq.s32.totalorder %s24, 7
        // Predicated region
        $region49: #{tpu_custom_call.1} parent=31 // pred_check
          %p1271 = pneg %p1270
        $region50: #{tpu_custom_call.1} parent=31 // pred_check_branch
          %1273 = sbr.rel (%p1271) target = $region52
        $region51: #{tpu_custom_call.1} parent=31 // pred_region
          %v1274 = vld [vmem:[#allocation2] sm:$0xff]
          %v1275 = vld [vmem:[#allocation2 + $0x8] sm:$0xff]
          %v1276 = vld [vmem:[#allocation2 + $0x10] sm:$0xff]
          %v1277 = vld [vmem:[#allocation2 + $0x18] sm:$0xff]
          %1278 = vst [vmem:[#allocation9] sm:$0xff] %v1274
          %1279 = vst [vmem:[#allocation9 + $0x8] sm:$0xff] %v1275
          %1280 = vst [vmem:[#allocation9 + $0x10] sm:$0xff] %v1276
          %1281 = vst [vmem:[#allocation9 + $0x18] sm:$0xff] %v1277
        $region52: #{tpu_custom_call.1} parent=31 // pred_fallthru
          _
        // Predicated region
        $region53: #{tpu_custom_call.1} parent=31 // pred_check
          %p1282 = pneg %p127
        $region54: #{tpu_custom_call.1} parent=31 // pred_check_branch
          %1284 = sbr.rel (%p1282) target = $region56
        $region55: #{tpu_custom_call.1} parent=31 // pred_region
          %s1286 = ssub.s32 512, 512
          %1287 = vsyncadd [#allocation5], %s1286
          %s1288 = smul.addr %s23, 4
          %s1289 = smul.addr %s1288, 128
          %s1290 = scalar_lea.hbm %s3, %s1289
          %s1292 = sshll.u32 [#allocation9], 4
          %s1293 = int_to_ptr.vmem [resolvable:$true] %s1292
          %1295 = dma.vmem_to_hbm [thread:$0]  %s1293, 512, %s1290, [#allocation5]
        $region56: #{tpu_custom_call.1} parent=31 // pred_fallthru
          _
        // Predicated region
        $region57: #{tpu_custom_call.1} parent=31 // pred_check
          %p1296 = pneg %p127
        $region58: #{tpu_custom_call.1} parent=31 // pred_check_branch
          %1298 = sbr.rel (%p1296) target = $region60
        $region59: #{tpu_custom_call.1} parent=31 // pred_region
          %1299 = dma.done [#allocation5], 512
        $region60: #{tpu_custom_call.1} parent=31 // pred_fallthru
          _
      $region32: #{tpu_custom_call.1} parent=5 // pred_fallthru
        _
      %p1300 = scmp.le.s32.totalorder 2, %s14
      // Predicated region
      $region61: #{tpu_custom_call.1} parent=5 // pred_check
        %p1301 = pneg %p1300
      $region62: #{tpu_custom_call.1} parent=5 // pred_check_branch
        %1303 = sbr.rel (%p1301) target = $region64
      $region63: #{tpu_custom_call.1} parent=5 // pred_region
        %s1304 = ssub.s32 %s14, 2
      $region64: #{tpu_custom_call.1} parent=5 // pred_fallthru
        _
    $region6: #{tpu_custom_call.1} parent=1 // loop_footer
      %s18 = sadd.s32 1, %s14
    $region7: #{tpu_custom_call.1} parent=1 // loop_footer_branch
      %13 = sbr.rel target = $region3
    $region8: #{tpu_custom_call.1} parent=1 // loop_exit
      _
    %1305 = vsyncpa [#allocation4], 1
    %s1306 = scalar_lea.sflag [#allocation4], 1
    %1307 = vsyncpa %s1306, 1
    %1308 = vsyncpa [#allocation7], 1
    %s1309 = scalar_lea.sflag [#allocation7], 1
    %1310 = vsyncpa %s1309, 1
    %1311 = vsyncpa [#allocation5], 1
    %s1312 = scalar_lea.sflag [#allocation5], 1
    %1313 = vsyncpa %s1312, 1

</llo_original>
